<compile_context>
chip_gen: v7x
topology: tpu7x:2x2x1
jax: 0.10.0
libtpu: 0.0.40
codegen_flags: <defaults>
</compile_context>

<pallas_src>
import jax
import jax.numpy as jnp
from jax.experimental import pallas as pl
from jax.experimental.pallas import tpu as pltpu

_MIB = 1024 * 1024


def _dequant_kernel(scale_ref, x_ref, o_ref):
    # scale is a single f32 scalar in SMEM; hoist the read, multiply on the
    # VPU in f32 (matches torch tensor-promotion), store at the output dtype.
    s = scale_ref[0]
    o_ref[...] = (x_ref[...].astype(jnp.float32) * s).astype(o_ref.dtype)


def _choose_cols(total, last_dim):
    """Pick a lane-dense slab width.

    Prefer a multiple of 128 (up to 32768) that exactly divides the element
    count, so every store is an unmasked full-lane vst.  Fall back to the
    original trailing dim (which always divides total and equals the full
    array dim, so the BlockSpec is still legal) — that path may produce
    lane-masked vst.msk stores and is the flagged slow path.
    """
    for c in range(8192, 127, -128):        # prefer moderate-to-large widths
        if total % c == 0:
            return c
    for c in range(8320, 32 * 1024 + 1, 128):  # rare: only a huge 128-multiple divides
        if total % c == 0:
            return c
    # TODO(synk): slow path — non-multiple-of-128 width => masked stores.
    return last_dim


def _tpu_vmem_and_v7():
    """(physical VMEM bytes, is_v7x) with conservative fallbacks."""
    vmem = 64 * _MIB  # conservative default = v7x per-TC physical
    try:
        vmem = int(pltpu.get_tpu_info().vmem_capacity_bytes)
    except Exception:
        pass
    kind = ""
    try:
        kind = jax.devices()[0].device_kind.lower().replace(" ", "")
    except Exception:
        pass
    is_v7 = ("v7" in kind) or ("tpu7" in kind)
    return vmem, is_v7


@jax.jit
def dequant(x, scale):
    """x: any-shape array (NCHW here). scale: f32 array of shape (1,)."""
    orig_shape = x.shape
    total = x.size
    in_sz = jnp.dtype(x.dtype).itemsize
    out_dtype = jnp.promote_types(x.dtype, jnp.float32)  # torch: x * f32 buffer
    out_sz = jnp.dtype(out_dtype).itemsize

    cols = _choose_cols(total, orig_shape[-1] if len(orig_shape) else 1)
    rows = total // cols

    # Generation-aware VMEM budget: the pipeline holds double-buffered
    # (input tile + output tile), i.e. 2 * block_rows * cols * (in+out) bytes.
    #   v5e / v6e: 128 MiB physical -> ~32 MiB of tiles, scoped limit 48 MiB
    #   v7x:        64 MiB physical -> ~24 MiB of tiles, scoped limit 32 MiB
    vmem_cap, is_v7 = _tpu_vmem_and_v7()
    if vmem_cap >= 128 * _MIB:
        pipeline_budget, vmem_limit = 32 * _MIB, 48 * _MIB
    else:
        pipeline_budget, vmem_limit = 24 * _MIB, 32 * _MIB

    # dtype-native sublane multiple: 8 (f32), 16 (bf16/f16), 32 (int8/fp8);
    # use the stricter of input/output so neither side needs a relayout.
    sublane = max(8, 32 // in_sz, 32 // out_sz)

    bytes_per_row = cols * (in_sz + out_sz)
    block_rows = max(1, pipeline_budget // (2 * bytes_per_row))  # 2x: double-buffer

    # v7x: keep >= 4 grid steps on large tensors so both TensorCores get
    # balanced work under CORE_PARALLEL.
    if is_v7 and rows >= 4 * sublane:
        cap = max(sublane, (pl.cdiv(rows, 4) // sublane) * sublane)
        block_rows = min(block_rows, cap)

    if block_rows >= rows:
        block_rows = rows  # single full-height block (legal: equals full dim)
    else:
        # round to the sublane multiple; never land strictly between 1 and
        # sublane with rows > block_rows (would violate the (8,128) rule)
        block_rows = max(sublane, (block_rows // sublane) * sublane)
        block_rows = min(block_rows, rows)

    grid_steps = pl.cdiv(rows, block_rows)  # partial last block masked; no pad

    if is_v7 and grid_steps >= 2:
        dim_sem = (pltpu.CORE_PARALLEL,)    # real 2-TC sharding on v7x
    else:
        dim_sem = ("parallel",)             # single-TC chips: plain pipeline

    x2d = x.reshape(rows, cols)             # contiguous flatten: free in XLA

    out2d = pl.pallas_call(
        _dequant_kernel,
        out_shape=jax.ShapeDtypeStruct((rows, cols), out_dtype),
        grid_spec=pltpu.PrefetchScalarGridSpec(
            num_scalar_prefetch=0,
            grid=(grid_steps,),
            in_specs=[
                pl.BlockSpec(memory_space=pltpu.MemorySpace.SMEM),   # scale (1,)
                pl.BlockSpec((block_rows, cols), lambda i: (i, 0)),  # x tile
            ],
            out_specs=pl.BlockSpec((block_rows, cols), lambda i: (i, 0)),
        ),
        compiler_params=pltpu.CompilerParams(
            dimension_semantics=dim_sem,
            vmem_limit_bytes=vmem_limit,
        ),
        cost_estimate=pl.CostEstimate(
            flops=total,
            transcendentals=0,
            bytes_accessed=total * (in_sz + out_sz) + 4,
        ),
        # TODO(synk): pass input_output_aliases={1: 0} when the caller donates x
        # and out_dtype == x.dtype; skipped here since aliasing an undonated
        # input forces a defensive copy (extra HBM traffic).
    )(scale, x2d)

    return out2d.reshape(orig_shape)


class DequantModule:
    """JAX analogue of the PyTorch Dequant module."""

    def __init__(self, out_scale: float):
        # Matches register_buffer('scale', tensor([out_scale], float32)).
        self.scale = jnp.array([out_scale], dtype=jnp.float32)

    def __call__(self, x):
        return dequant(x, self.scale)


if __name__ == "__main__":
    key = jax.random.PRNGKey(0)
    # NCHW input, consistent with typical conv-quantization usage.
    x = jax.random.normal(key, (2, 4, 16, 16), dtype=jnp.float32)

    out_scale = 0.0125  # deterministic synthetic scale
    mod = DequantModule(out_scale)

    # f32 path
    y = mod(x)
    jax.block_until_ready(y)
    ref = x * jnp.float32(out_scale)
    assert y.shape == x.shape and y.dtype == jnp.float32
    assert jnp.allclose(y, ref, rtol=1e-6, atol=1e-6)

    # bf16 input -> f32 output (torch promotion semantics)
    xb = x.astype(jnp.bfloat16)
    yb = mod(xb)
    jax.block_until_ready(yb)
    assert yb.dtype == jnp.float32
    assert jnp.allclose(yb, xb.astype(jnp.float32) * jnp.float32(out_scale),
                        rtol=1e-2, atol=1e-2)

    # int8 (quantized) input -> f32 output, the canonical dequant use-case
    xi = (x * 10.0).astype(jnp.int8)
    yi = mod(xi)
    jax.block_until_ready(yi)
    assert yi.dtype == jnp.float32
    assert jnp.allclose(yi, xi.astype(jnp.float32) * jnp.float32(out_scale),
                        rtol=1e-6, atol=1e-6)

    print("KERNEL_OK")
</pallas_src>

<mosaic_0001>
module attributes {stable_mosaic.version = 11 : i64} {
  func.func @_dequant_kernel(%arg0: i32, %arg1: memref<1xf32, #tpu.memory_space<smem>>, %arg2: memref<1x2048xf32, #tpu.memory_space<vmem>>, %arg3: memref<1x2048xf32, #tpu.memory_space<vmem>>) attributes {dimension_semantics = [#tpu.dimension_semantics<parallel>], iteration_bounds = array<i64: 1>, scalar_prefetch = 0 : i64, scratch_operands = 0 : i64, tpu.core_type = #tpu.core_type<tc>, window_params = [{transform_indices = @transform_0, window_bounds = array<i64: 1>}, {transform_indices = @transform_1, window_bounds = array<i64: 1, 2048>}, {transform_indices = @transform_2, window_bounds = array<i64: 1, 2048>}]} {
    %c0 = arith.constant 0 : index
    %0 = memref.load %arg1[%c0] : memref<1xf32, #tpu.memory_space<smem>>
    %c0_0 = arith.constant 0 : index
    %c0_1 = arith.constant 0 : index
    %1 = vector.load %arg2[%c0_0, %c0_1] : memref<1x2048xf32, #tpu.memory_space<vmem>>, vector<1x2048xf32>
    %2 = vector.broadcast %0 : f32 to vector<1x2048xf32>
    %3 = arith.mulf %1, %2 : vector<1x2048xf32>
    %c0_2 = arith.constant 0 : index
    %c0_3 = arith.constant 0 : index
    %4 = vector.load %arg3[%c0_2, %c0_3] : memref<1x2048xf32, #tpu.memory_space<vmem>>, vector<1x2048xf32>
    tpu.vector_store %arg3[%c0_2, %c0_3], %3 {strides = array<i32>} : memref<1x2048xf32, #tpu.memory_space<vmem>>, vector<1x2048xf32>,
    return
  }
  func.func @transform_0(%arg0: i32) -> i32 {
    %c0_i32 = arith.constant 0 : i32
    %c0_i32_0 = arith.constant 0 : i32
    return %c0_i32 : i32
  }
  func.func @transform_1(%arg0: i32) -> (i32, i32) {
    %c0_i32 = arith.constant 0 : i32
    %c0_i32_0 = arith.constant 0 : i32
    return %arg0, %c0_i32 : i32, i32
  }
  func.func @transform_2(%arg0: i32) -> (i32, i32) {
    %c0_i32 = arith.constant 0 : i32
    %c0_i32_0 = arith.constant 0 : i32
    return %arg0, %c0_i32 : i32, i32
  }
}

</mosaic_0001>

<llo_original>
// kernel: dequant.1
$region0: #{dequant.1}
  #allocation0 [shape = 'u32[]', space=smem, size = 0x4, offset = 0x4, fixed_abs, tag = 'smem constant byte address 0x4 - core index']
  #allocation1 [shape = 'u32[144,128]{1,0:T(1,128)}', space=vmem, size = 0x12000, scoped, tag = 'internal scratch']
  #allocation2 [shape = 'f32[1]{0:T(128)S(6)}', space=smem, size = 0x200, scoped, tag = 'scoped memory for dequant.1']
  %s0 = inlined_call_operand.<no memory space> [shape: f32[1], index: 0, kind: input, shape index: {}]
  %s1 = inlined_call_operand.vmem [shape: f32[1,2048], index: 1, kind: input, shape index: {}]
  %s2 = inlined_call_operand.vmem [shape: f32[1,2048], index: 2, kind: output, shape index: {}]
  %s3 = sld [smem:[#allocation0]]
  $region18: #{dequant.1} parent=0
    _
  %s5 = ssub.s32 1, %s3
  %s6 = scalar_select 0, %s5, %s3
  %7 = sst [smem:[#allocation2]] %s0
  // Predicated region
  $region2: #{dequant.1} parent=0 // pred_check
    _
  $region3: #{dequant.1} parent=0 // pred_check_branch
    %9 = sbr.rel (0) target = $region5
  $region4: #{dequant.1} parent=0 // pred_region
    _
  $region5: #{dequant.1} parent=0 // pred_fallthru
    _
  // Predicated region
  $region6: #{dequant.1} parent=0 // pred_check
    _
  $region7: #{dequant.1} parent=0 // pred_check_branch
    %11 = sbr.rel (0) target = $region9
  $region8: #{dequant.1} parent=0 // pred_region
    _
  $region9: #{dequant.1} parent=0 // pred_fallthru
    _
  %s12 = sld [smem:[#allocation2]]
  %v13 = vld [vmem:[%s1] sm:$0xff]
  %v14 = vld [vmem:[%s1 + $0x8] sm:$0xff]
  %v15 = vstv %s12
  %v16 = vmul.f32 %v13, %v15
  %v17 = vmul.f32 %v14, %v15
  %18 = vst [vmem:[%s2] sm:$0xff] %v16
  %19 = vst [vmem:[%s2 + $0x8] sm:$0xff] %v17
  // Predicated region
  $region10: #{dequant.1} parent=0 // pred_check
    _
  $region11: #{dequant.1} parent=0 // pred_check_branch
    %21 = sbr.rel (0) target = $region13
  $region12: #{dequant.1} parent=0 // pred_region
    _
  $region13: #{dequant.1} parent=0 // pred_fallthru
    _
  // Predicated region
  $region14: #{dequant.1} parent=0 // pred_check
    _
  $region15: #{dequant.1} parent=0 // pred_check_branch
    %23 = sbr.rel (0) target = $region17
  $region16: #{dequant.1} parent=0 // pred_region
    _
  $region17: #{dequant.1} parent=0 // pred_fallthru
    _

</llo_original>
